<compile_context>
chip_gen: v7x
topology: tpu7x:2x2x1
jax: 0.10.0
libtpu: 0.0.40
codegen_flags: <defaults>
</compile_context>

<pallas_src>
import functools

import jax
import jax.numpy as jnp
from jax.experimental import pallas as pl
from jax.experimental.pallas import tpu as pltpu


def _round_up(x, m):
    return (x + m - 1) // m * m


def _cdiv(a, b):
    return -(-a // b)


def _actor_kernel(x_ref, p1_ref, p2_ref, ph_ref, out_ref, *,
                  sd_p, hd_p, half, nan_patch):
    """Fused forward pass for one batch tile.

    p1: (sd_p + 8, hd_p)  rows [0, sd_p) = W1 (zero padded), row sd_p = b1
    p2: (hd_p + 8, hd_p)  rows [0, hd_p) = W2 (zero padded), row hd_p = b2
    ph: (hd_p + 8, 2*half) packed [Wm | Ws] (zero padded), row hd_p = [bm | bs]
    out: (tb, 2*half) bf16 slab -> mean lanes [0, half), std lanes [half, 2*half)
    All slices below start on (8, 128)-aligned offsets (sd_p % 8 == 0,
    hd_p % 128 == 0), so loads are unmasked and MXU operands are full-lane.
    """
    x = x_ref[...]  # (tb, sd_p) bf16

    # feature_extractor: Linear -> ReLU -> Linear -> ReLU (f32 accumulation)
    w1 = p1_ref[:sd_p, :]
    b1 = p1_ref[sd_p:sd_p + 1, :].astype(jnp.float32)
    h = jnp.dot(x, w1, preferred_element_type=jnp.float32) + b1
    h = jnp.maximum(h, 0.0)

    w2 = p2_ref[:hd_p, :]
    b2 = p2_ref[hd_p:hd_p + 1, :].astype(jnp.float32)
    h = jnp.dot(h.astype(jnp.bfloat16), w2,
                preferred_element_type=jnp.float32) + b2
    h = jnp.maximum(h, 0.0)
    # TODO(synk): PyTorch's randn_like NaN-patch on `features` is skipped
    # (non-deterministic; no-op for finite inputs).

    # Fused mean/std heads: single matmul against the packed, lane-dense head.
    wh = ph_ref[:hd_p, :]
    bh = ph_ref[hd_p:hd_p + 1, :].astype(jnp.float32)
    logits = jnp.dot(h.astype(jnp.bfloat16), wh,
                     preferred_element_type=jnp.float32) + bh

    # (1, out_w) lane mask, broadcast by jnp.where (no full (tb,128) iota slab).
    col = jax.lax.broadcasted_iota(jnp.int32, (1, 2 * half), 1)
    is_mean = col < half

    if nan_patch:
        # Logits-level NaN patch: mean logits -> 0.0, log_std -> -2.0
        # (matches the PyTorch module for finite features).
        logits = jnp.where(jnp.isnan(logits),
                           jnp.where(is_mean, 0.0, -2.0), logits)

    mean = (jnp.tanh(logits) + 1.0) * 0.5
    # clip is applied to the whole slab; mean lanes are selected from the tanh
    # path below, so clipping them is harmless.
    std = jnp.exp(jnp.clip(logits, -20.0, 2.0))

    out_ref[...] = jnp.where(is_mean, mean, std).astype(out_ref.dtype)


def pack_params(params, dtype=jnp.bfloat16):
    """Pack + pad + downcast raw params once (outside the hot path).

    Returns 3 arrays (one per layer, bias row appended), zero-padded so every
    in-kernel slice is (8, 128) tile aligned.
    """
    state_dim, hidden_dim = params["w1"].shape
    action_dim = params["wm"].shape[1]

    sd_p = _round_up(state_dim, 8)
    hd_p = _round_up(hidden_dim, 128)
    half = max(64, _round_up(action_dim, 64))  # 2*half >= 128, lane-dense head

    p1 = jnp.zeros((sd_p + 8, hd_p), jnp.float32)
    p1 = p1.at[:state_dim, :hidden_dim].set(params["w1"])
    p1 = p1.at[sd_p, :hidden_dim].set(params["b1"][0])

    p2 = jnp.zeros((hd_p + 8, hd_p), jnp.float32)
    p2 = p2.at[:hidden_dim, :hidden_dim].set(params["w2"])
    p2 = p2.at[hd_p, :hidden_dim].set(params["b2"][0])

    ph = jnp.zeros((hd_p + 8, 2 * half), jnp.float32)
    ph = ph.at[:hidden_dim, :action_dim].set(params["wm"])
    ph = ph.at[:hidden_dim, half:half + action_dim].set(params["ws"])
    ph = ph.at[hd_p, :action_dim].set(params["bm"][0])
    ph = ph.at[hd_p, half:half + action_dim].set(params["bs"][0])

    return p1.astype(dtype), p2.astype(dtype), ph.astype(dtype)


def _choose_tile(batch, tile_batch):
    if batch <= 16:
        return batch  # single full-batch tile (block == full array, legal)
    # >= 2 grid steps so the "parallel" batch axis shards across v7x's 2 TCs.
    return min(tile_batch, _round_up(_cdiv(batch, 2), 8))


@functools.partial(jax.jit,
                   static_argnames=("action_dim", "tile_batch", "nan_patch"))
def continuous_actor_forward(state, p1, p2, ph, *, action_dim,
                             tile_batch=1024, nan_patch=True):
    """ContinuousActor forward via one fused Pallas TPU kernel.

    state: (batch, state_dim) or (state_dim,) float
    p1/p2/ph: packed params from pack_params()
    returns: (mean, std), each (batch, action_dim) float32
    """
    if state.ndim == 1:
        state = state[None, :]

    batch, state_dim = state.shape
    sd_p = p1.shape[0] - 8
    hd_p = p2.shape[0] - 8
    out_w = ph.shape[1]
    half = out_w // 2
    assert state_dim <= sd_p, "state_dim larger than packed params"

    tb = _choose_tile(batch, tile_batch)
    pb = _round_up(batch, tb)
    grid = (pb // tb,)

    # bf16 input stream + zero pad (batch -> pb rows, state_dim -> sd_p lanes).
    x = jnp.pad(state.astype(jnp.bfloat16),
                ((0, pb - batch), (0, sd_p - state_dim)))

    kernel = functools.partial(_actor_kernel, sd_p=sd_p, hd_p=hd_p,
                               half=half, nan_patch=nan_patch)

    cost = pl.CostEstimate(
        flops=2 * pb * (sd_p * hd_p + hd_p * hd_p + hd_p * out_w),
        transcendentals=2 * pb * out_w,
        bytes_accessed=2 * (pb * sd_p + p1.size + p2.size + ph.size
                            + pb * out_w),
    )

    out = pl.pallas_call(
        kernel,
        out_shape=jax.ShapeDtypeStruct((pb, out_w), jnp.bfloat16),
        grid=grid,
        in_specs=[
            pl.BlockSpec((tb, sd_p), lambda i: (i, 0)),
            # Params: constant index_map -> resident in VMEM across the grid.
            # (pipeline_mode=pl.Buffered(1) would drop their redundant second
            #  buffer; skipped here — negligible at these sizes.)
            pl.BlockSpec(p1.shape, lambda i: (0, 0)),
            pl.BlockSpec(p2.shape, lambda i: (0, 0)),
            pl.BlockSpec(ph.shape, lambda i: (0, 0)),
        ],
        out_specs=pl.BlockSpec((tb, out_w), lambda i: (i, 0)),
        compiler_params=pltpu.CompilerParams(
            dimension_semantics=("parallel",),
            # Above v5e's 16 MiB scoped default, under v7x's 64 MiB physical.
            vmem_limit_bytes=48 * 1024 * 1024,
        ),
        cost_estimate=cost,
    )(x, p1, p2, ph)

    mean = out[:batch, :action_dim].astype(jnp.float32)
    std = out[:batch, half:half + action_dim].astype(jnp.float32)
    return mean, std


def init_params(key, state_dim, action_dim, hidden_dim):
    """Deterministic, PyTorch-Linear-style uniform init (fan_in based)."""
    keys = jax.random.split(key, 8)

    def lin(kw, kb, fan_in, fan_out):
        bound = 1.0 / jnp.sqrt(jnp.asarray(fan_in, jnp.float32))
        w = jax.random.uniform(kw, (fan_in, fan_out), jnp.float32, -bound, bound)
        b = jax.random.uniform(kb, (1, fan_out), jnp.float32, -bound, bound)
        return w, b

    w1, b1 = lin(keys[0], keys[1], state_dim, hidden_dim)
    w2, b2 = lin(keys[2], keys[3], hidden_dim, hidden_dim)
    wm, bm = lin(keys[4], keys[5], hidden_dim, action_dim)
    ws, bs = lin(keys[6], keys[7], hidden_dim, action_dim)
    return {"w1": w1, "b1": b1, "w2": w2, "b2": b2,
            "wm": wm, "bm": bm, "ws": ws, "bs": bs}


def _reference_forward(state, p):
    """Pure-JAX f32 reference for correctness checking."""
    if state.ndim == 1:
        state = state[None, :]
    h = jnp.maximum(state @ p["w1"] + p["b1"], 0.0)
    h = jnp.maximum(h @ p["w2"] + p["b2"], 0.0)
    mean = (jnp.tanh(h @ p["wm"] + p["bm"]) + 1.0) * 0.5
    log_std = jnp.clip(h @ p["ws"] + p["bs"], -20.0, 2.0)
    return mean, jnp.exp(log_std)


if __name__ == "__main__":
    state_dim, action_dim, hidden_dim, batch = 16, 4, 32, 2

    key = jax.random.PRNGKey(0)
    k_params, k_state, k_state2 = jax.random.split(key, 3)
    params = init_params(k_params, state_dim, action_dim, hidden_dim)
    p1, p2, ph = pack_params(params)

    # bf16 weights/activations/output -> loosened tolerance vs f32 reference.
    TOL = dict(atol=5e-2, rtol=5e-2)

    # Small-batch path (single full-batch tile).
    state = jax.random.normal(k_state, (batch, state_dim), jnp.float32)
    mean, std = continuous_actor_forward(state, p1, p2, ph,
                                         action_dim=action_dim)
    jax.block_until_ready((mean, std))

    ref_mean, ref_std = _reference_forward(state, params)
    assert mean.shape == (batch, action_dim) and std.shape == (batch, action_dim)
    assert jnp.allclose(mean, ref_mean, **TOL)
    assert jnp.allclose(std, ref_std, **TOL)
    assert bool(jnp.all(std > 0.0))

    # Multi-tile path (exercises the batch grid, padding, >=2 grid steps).
    state2 = jax.random.normal(k_state2, (20, state_dim), jnp.float32)
    mean2, std2 = continuous_actor_forward(state2, p1, p2, ph,
                                           action_dim=action_dim, tile_batch=8)
    jax.block_until_ready((mean2, std2))
    ref_mean2, ref_std2 = _reference_forward(state2, params)
    assert mean2.shape == (20, action_dim) and std2.shape == (20, action_dim)
    assert jnp.allclose(mean2, ref_mean2, **TOL)
    assert jnp.allclose(std2, ref_std2, **TOL)
    assert bool(jnp.all(std2 > 0.0))

    print("KERNEL_OK")
</pallas_src>

<mosaic_0001>
module attributes {stable_mosaic.version = 11 : i64} {
  func.func @_actor_kernel(%arg0: i32, %arg1: memref<2x16xbf16, #tpu.memory_space<vmem>>, %arg2: memref<24x128xbf16, #tpu.memory_space<vmem>>, %arg3: memref<136x128xbf16, #tpu.memory_space<vmem>>, %arg4: memref<136x128xbf16, #tpu.memory_space<vmem>>, %arg5: memref<2x128xbf16, #tpu.memory_space<vmem>>) attributes {dimension_semantics = [#tpu.dimension_semantics<parallel>], iteration_bounds = array<i64: 1>, scalar_prefetch = 0 : i64, scratch_operands = 0 : i64, tpu.core_type = #tpu.core_type<tc>, window_params = [{transform_indices = @transform_0, window_bounds = array<i64: 2, 16>}, {pipeline_mode = #tpu.pipeline_mode<synchronous>, transform_indices = @transform_1, window_bounds = array<i64: 24, 128>}, {pipeline_mode = #tpu.pipeline_mode<synchronous>, transform_indices = @transform_2, window_bounds = array<i64: 136, 128>}, {pipeline_mode = #tpu.pipeline_mode<synchronous>, transform_indices = @transform_3, window_bounds = array<i64: 136, 128>}, {transform_indices = @transform_4, window_bounds = array<i64: 2, 128>}]} {
    %c0 = arith.constant 0 : index
    %c0_0 = arith.constant 0 : index
    %0 = vector.load %arg1[%c0, %c0_0] : memref<2x16xbf16, #tpu.memory_space<vmem>>, vector<2x16xbf16>
    %c0_1 = arith.constant 0 : index
    %c0_2 = arith.constant 0 : index
    %1 = vector.load %arg2[%c0_1, %c0_2] : memref<24x128xbf16, #tpu.memory_space<vmem>>, vector<16x128xbf16>
    %c16 = arith.constant 16 : index
    %c0_3 = arith.constant 0 : index
    %2 = vector.load %arg2[%c16, %c0_3] : memref<24x128xbf16, #tpu.memory_space<vmem>>, vector<1x128xbf16>
    %3 = arith.extf %2 : vector<1x128xbf16> to vector<1x128xf32>
    %cst = arith.constant dense<0.000000e+00> : vector<2x128xf32>
    %4 = tpu.matmul %0, %1, %cst {dimension_numbers = #tpu.dot_dimension_numbers<[1], [0], [0], [1], [0, 0, 1, 1], [], []>} : vector<2x16xbf16>, vector<16x128xbf16>, vector<2x128xf32> -> vector<2x128xf32>
    %5 = vector.broadcast %3 : vector<1x128xf32> to vector<2x128xf32>
    %6 = arith.addf %4, %5 : vector<2x128xf32>
    %cst_4 = arith.constant 0.000000e+00 : f32
    %7 = vector.broadcast %cst_4 : f32 to vector<2x128xf32>
    %8 = arith.maximumf %6, %7 : vector<2x128xf32>
    %c0_5 = arith.constant 0 : index
    %c0_6 = arith.constant 0 : index
    %9 = vector.load %arg3[%c0_5, %c0_6] : memref<136x128xbf16, #tpu.memory_space<vmem>>, vector<128x128xbf16>
    %c128 = arith.constant 128 : index
    %c0_7 = arith.constant 0 : index
    %10 = vector.load %arg3[%c128, %c0_7] : memref<136x128xbf16, #tpu.memory_space<vmem>>, vector<1x128xbf16>
    %11 = arith.extf %10 : vector<1x128xbf16> to vector<1x128xf32>
    %12 = arith.truncf %8 : vector<2x128xf32> to vector<2x128xbf16>
    %cst_8 = arith.constant dense<0.000000e+00> : vector<2x128xf32>
    %13 = tpu.matmul %12, %9, %cst_8 {dimension_numbers = #tpu.dot_dimension_numbers<[1], [0], [0], [1], [0, 0, 1, 1], [], []>} : vector<2x128xbf16>, vector<128x128xbf16>, vector<2x128xf32> -> vector<2x128xf32>
    %14 = vector.broadcast %11 : vector<1x128xf32> to vector<2x128xf32>
    %15 = arith.addf %13, %14 : vector<2x128xf32>
    %cst_9 = arith.constant 0.000000e+00 : f32
    %16 = vector.broadcast %cst_9 : f32 to vector<2x128xf32>
    %17 = arith.maximumf %15, %16 : vector<2x128xf32>
    %c0_10 = arith.constant 0 : index
    %c0_11 = arith.constant 0 : index
    %18 = vector.load %arg4[%c0_10, %c0_11] : memref<136x128xbf16, #tpu.memory_space<vmem>>, vector<128x128xbf16>
    %c128_12 = arith.constant 128 : index
    %c0_13 = arith.constant 0 : index
    %19 = vector.load %arg4[%c128_12, %c0_13] : memref<136x128xbf16, #tpu.memory_space<vmem>>, vector<1x128xbf16>
    %20 = arith.extf %19 : vector<1x128xbf16> to vector<1x128xf32>
    %21 = arith.truncf %17 : vector<2x128xf32> to vector<2x128xbf16>
    %cst_14 = arith.constant dense<0.000000e+00> : vector<2x128xf32>
    %22 = tpu.matmul %21, %18, %cst_14 {dimension_numbers = #tpu.dot_dimension_numbers<[1], [0], [0], [1], [0, 0, 1, 1], [], []>} : vector<2x128xbf16>, vector<128x128xbf16>, vector<2x128xf32> -> vector<2x128xf32>
    %23 = vector.broadcast %20 : vector<1x128xf32> to vector<2x128xf32>
    %24 = arith.addf %22, %23 : vector<2x128xf32>
    %25 = tpu.iota {dimensions = array<i32: 1>} : vector<1x128xi32>
    %c64_i32 = arith.constant 64 : i32
    %26 = vector.broadcast %c64_i32 : i32 to vector<1x128xi32>
    %27 = arith.cmpi slt, %25, %26 : vector<1x128xi32>
    %28 = arith.cmpf one, %24, %24 : vector<2x128xf32>
    %cst_15 = arith.constant 0.000000e+00 : f32
    %cst_16 = arith.constant -2.000000e+00 : f32
    %29 = vector.broadcast %cst_15 : f32 to vector<1x128xf32>
    %30 = vector.broadcast %cst_16 : f32 to vector<1x128xf32>
    %31 = arith.select %27, %29, %30 : vector<1x128xi1>, vector<1x128xf32>
    %32 = vector.shape_cast %31 : vector<1x128xf32> to vector<1x128xf32>
    %33 = vector.broadcast %32 : vector<1x128xf32> to vector<2x128xf32>
    %34 = arith.select %28, %33, %24 : vector<2x128xi1>, vector<2x128xf32>
    %35 = math.tanh %34 : vector<2x128xf32>
    %cst_17 = arith.constant 1.000000e+00 : f32
    %36 = vector.broadcast %cst_17 : f32 to vector<2x128xf32>
    %37 = arith.addf %35, %36 : vector<2x128xf32>
    %cst_18 = arith.constant 5.000000e-01 : f32
    %38 = vector.broadcast %cst_18 : f32 to vector<2x128xf32>
    %39 = arith.mulf %37, %38 : vector<2x128xf32>
    %cst_19 = arith.constant -2.000000e+01 : f32
    %cst_20 = arith.constant 2.000000e+00 : f32
    %40 = vector.broadcast %cst_19 : f32 to vector<2x128xf32>
    %41 = arith.maximumf %40, %34 : vector<2x128xf32>
    %42 = vector.broadcast %cst_20 : f32 to vector<2x128xf32>
    %43 = arith.minimumf %42, %41 : vector<2x128xf32>
    %44 = math.exp %43 : vector<2x128xf32>
    %45 = vector.shape_cast %27 : vector<1x128xi1> to vector<1x128xi1>
    %46 = vector.broadcast %45 : vector<1x128xi1> to vector<2x128xi1>
    %47 = arith.select %46, %39, %44 : vector<2x128xi1>, vector<2x128xf32>
    %48 = arith.truncf %47 : vector<2x128xf32> to vector<2x128xbf16>
    %c0_21 = arith.constant 0 : index
    %c0_22 = arith.constant 0 : index
    %49 = vector.load %arg5[%c0_21, %c0_22] : memref<2x128xbf16, #tpu.memory_space<vmem>>, vector<2x128xbf16>
    tpu.vector_store %arg5[%c0_21, %c0_22], %48 {strides = array<i32>} : memref<2x128xbf16, #tpu.memory_space<vmem>>, vector<2x128xbf16>,
    return
  }
  func.func @transform_0(%arg0: i32) -> (i32, i32) {
    %c0_i32 = arith.constant 0 : i32
    %c0_i32_0 = arith.constant 0 : i32
    return %arg0, %c0_i32 : i32, i32
  }
  func.func @transform_1(%arg0: i32) -> (i32, i32) {
    %c0_i32 = arith.constant 0 : i32
    %c0_i32_0 = arith.constant 0 : i32
    %c0_i32_1 = arith.constant 0 : i32
    return %c0_i32, %c0_i32_0 : i32, i32
  }
  func.func @transform_2(%arg0: i32) -> (i32, i32) {
    %c0_i32 = arith.constant 0 : i32
    %c0_i32_0 = arith.constant 0 : i32
    %c0_i32_1 = arith.constant 0 : i32
    return %c0_i32, %c0_i32_0 : i32, i32
  }
  func.func @transform_3(%arg0: i32) -> (i32, i32) {
    %c0_i32 = arith.constant 0 : i32
    %c0_i32_0 = arith.constant 0 : i32
    %c0_i32_1 = arith.constant 0 : i32
    return %c0_i32, %c0_i32_0 : i32, i32
  }
  func.func @transform_4(%arg0: i32) -> (i32, i32) {
    %c0_i32 = arith.constant 0 : i32
    %c0_i32_0 = arith.constant 0 : i32
    return %arg0, %c0_i32 : i32, i32
  }
}

</mosaic_0001>

<llo_original>
// kernel: continuous_actor_forward.1
$region0: #{continuous_actor_forward.1}
  #allocation0 [shape = 'u32[]', space=smem, size = 0x4, offset = 0x4, fixed_abs, tag = 'smem constant byte address 0x4 - core index']
  #allocation1 [shape = 'u32[144,128]{1,0:T(1,128)}', space=vmem, size = 0x12000, scoped, tag = 'internal scratch']
  %s0 = inlined_call_operand.vmem [shape: bf16[2,16], index: 0, kind: input, shape index: {}]
  %s1 = inlined_call_operand.hbm [shape: bf16[24,128], index: 1, kind: input, shape index: {}]
  %s2 = inlined_call_operand.hbm [shape: bf16[136,128], index: 2, kind: input, shape index: {}]
  %s3 = inlined_call_operand.hbm [shape: bf16[136,128], index: 3, kind: input, shape index: {}]
  %s4 = inlined_call_operand.vmem [shape: bf16[2,128], index: 4, kind: output, shape index: {}]
  %s5 = sld [smem:[#allocation0]]
  $region38: #{continuous_actor_forward.1} parent=0
    _
  %s7 = ssub.s32 1, %s5
  %s8 = scalar_select 0, %s7, %s5
  $region1: #{continuous_actor_forward.1} parent=0
    #allocation2 [shape = 'u8[6144]{0}', space=vmem, size = 0x1800, scoped, tag = 'input window, operand 1, single buffered']
    #allocation3 [shape = 's32[1]{0}', space=sflag, size = 0x4, scoped, tag = 'scoped memory for continuous_actor_forward.1']
    #allocation4 [shape = 'u8[34816]{0}', space=vmem, size = 0x8800, scoped, tag = 'input window, operand 2, single buffered']
    #allocation5 [shape = 's32[1]{0}', space=sflag, size = 0x4, scoped, tag = 'scoped memory for continuous_actor_forward.1']
    #allocation6 [shape = 'u8[34816]{0}', space=vmem, size = 0x8800, scoped, tag = 'input window, operand 3, single buffered']
    %9 = vsyncpa [#allocation3], 0
    %10 = vsyncpa [#allocation5], 0
    // Predicated region
    $region2: #{continuous_actor_forward.1} parent=1 // pred_check
      _
    $region3: #{continuous_actor_forward.1} parent=1 // pred_check_branch
      %12 = sbr.rel (0) target = $region5
    $region4: #{continuous_actor_forward.1} parent=1 // pred_region
      _
    $region5: #{continuous_actor_forward.1} parent=1 // pred_fallthru
      _
    // Predicated region
    $region6: #{continuous_actor_forward.1} parent=1 // pred_check
      _
    $region7: #{continuous_actor_forward.1} parent=1 // pred_check_branch
      %14 = sbr.rel (0) target = $region9
    $region8: #{continuous_actor_forward.1} parent=1 // pred_region
      %s16 = ssub.s32 192, 192
      %17 = vsyncadd [#allocation3], %s16
      %s18 = sshll.u32 [#allocation2], 4
      %s19 = int_to_ptr.vmem [resolvable:$true] %s18
      %24 = dma.hbm_to_vmem [thread:$0]  %s1, 192, %s19, [#allocation3], 64, 64, 4
    $region9: #{continuous_actor_forward.1} parent=1 // pred_fallthru
      _
    // Predicated region
    $region10: #{continuous_actor_forward.1} parent=1 // pred_check
      _
    $region11: #{continuous_actor_forward.1} parent=1 // pred_check_branch
      %26 = sbr.rel (0) target = $region13
    $region12: #{continuous_actor_forward.1} parent=1 // pred_region
      %s28 = ssub.s32 1088, 1088
      %29 = vsyncadd [#allocation5], %s28
      %s30 = sshll.u32 [#allocation4], 4
      %s31 = int_to_ptr.vmem [resolvable:$true] %s30
      %36 = dma.hbm_to_vmem [thread:$0]  %s2, 1088, %s31, [#allocation5], 64, 64, 4
    $region13: #{continuous_actor_forward.1} parent=1 // pred_fallthru
      _
    // Predicated region
    $region14: #{continuous_actor_forward.1} parent=1 // pred_check
      _
    $region15: #{continuous_actor_forward.1} parent=1 // pred_check_branch
      %38 = sbr.rel (0) target = $region17
    $region16: #{continuous_actor_forward.1} parent=1 // pred_region
      %s40 = ssub.s32 1088, 1088
      %41 = vsyncadd [#allocation5], %s40
      %s42 = sshll.u32 [#allocation6], 4
      %s43 = int_to_ptr.vmem [resolvable:$true] %s42
      %48 = dma.hbm_to_vmem [thread:$0]  %s3, 1088, %s43, [#allocation5], 64, 64, 4
    $region17: #{continuous_actor_forward.1} parent=1 // pred_fallthru
      _
    // Predicated region
    $region18: #{continuous_actor_forward.1} parent=1 // pred_check
      _
    $region19: #{continuous_actor_forward.1} parent=1 // pred_check_branch
      %50 = sbr.rel (0) target = $region21
    $region20: #{continuous_actor_forward.1} parent=1 // pred_region
      %51 = dma.done [#allocation3], 192
    $region21: #{continuous_actor_forward.1} parent=1 // pred_fallthru
      _
    // Predicated region
    $region22: #{continuous_actor_forward.1} parent=1 // pred_check
      _
    $region23: #{continuous_actor_forward.1} parent=1 // pred_check_branch
      %53 = sbr.rel (0) target = $region25
    $region24: #{continuous_actor_forward.1} parent=1 // pred_region
      %54 = dma.done [#allocation5], 1088
    $region25: #{continuous_actor_forward.1} parent=1 // pred_fallthru
      _
    // Predicated region
    $region26: #{continuous_actor_forward.1} parent=1 // pred_check
      _
    $region27: #{continuous_actor_forward.1} parent=1 // pred_check_branch
      %56 = sbr.rel (0) target = $region29
    $region28: #{continuous_actor_forward.1} parent=1 // pred_region
      %57 = dma.done [#allocation5], 1088
    $region29: #{continuous_actor_forward.1} parent=1 // pred_fallthru
      _
    %v59 = vld [vmem:[%s0] sm:$0x1]
    %v60 = vld [vmem:[#allocation2] sm:$0xf]
    %v61 = vld [vmem:[#allocation2 + $0x4] sm:$0xf]
    %v62 = vld [vmem:[#allocation2 + $0x8] sm:$0x1]
    %v63 = vunpack.c.l.bf16 %v62
    %v64 = vlaneseq
    %v65 = vshrl.u32 %v64, 7
    %v66 = vsub.s32 0, %v65
    %v67 = vrot.slane %v63, %v66
    %v70 = vunpack.c.l.b16 %v60
    %v71 = vunpack.c.l.b16 %v61
    %v72 = vpack.c.b16 %v71, %v70
    %vm74 = vcmask 130048
    %v76 = vsel %vm74, %v59, 0
    %78 = vmatprep.subr.bf16.mxu0 0
    %79 = vmatpush1.bf16.msra.mxu0 %v72
    %80 = vmatprep.subr.bf16.mxu0 0
    %81 = vmatpush1.bf16.msra.mxu0 0
    %82 = vmatprep.subr.bf16.mxu0 0
    %83 = vmatpush1.bf16.msra.mxu0 0
    %84 = vmatprep.subr.bf16.mxu0 0
    %85 = vmatpush1.bf16.msra.mxu0 0
    %86 = vmatprep.subr.bf16.mxu0 0
    %87 = vmatpush1.bf16.msra.mxu0 0
    %88 = vmatprep.subr.bf16.mxu0 0
    %89 = vmatpush1.bf16.msra.mxu0 0
    %90 = vmatprep.subr.bf16.mxu0 0
    %91 = vmatpush1.bf16.msra.mxu0 0
    %92 = vmatprep.subr.bf16.mxu0 0
    %93 = vmatpush1.bf16.msra.mxu0 0
    %94 = vmatprep.subr.bf16.mxu0 0
    %95 = vmatpush1.bf16.msra.mxu0 0
    %96 = vmatprep.subr.bf16.mxu0 0
    %97 = vmatpush1.bf16.msra.mxu0 0
    %98 = vmatprep.subr.bf16.mxu0 0
    %99 = vmatpush1.bf16.msra.mxu0 0
    %100 = vmatprep.subr.bf16.mxu0 0
    %101 = vmatpush1.bf16.msra.mxu0 0
    %102 = vmatprep.subr.bf16.mxu0 0
    %103 = vmatpush1.bf16.msra.mxu0 0
    %104 = vmatprep.subr.bf16.mxu0 0
    %105 = vmatpush1.bf16.msra.mxu0 0
    %106 = vmatprep.subr.bf16.mxu0 0
    %107 = vmatpush1.bf16.msra.mxu0 0
    %108 = vmatprep.subr.bf16.mxu0 0
    %109 = vmatpush1.bf16.msra.mxu0 0
    %110 = vmatprep.mubr.bf16.mxu0 0
    %111 = vmatmul.mubr.bf16.gmra.mrb[0].mxu0 %v76
    %v112 = vpop.f32.mrb[0].mxu0
    %v113 = vadd.f32 %v67, %v112
    %v114 = vpop.f32.mrb[0].mxu0
    %v115 = vpop.f32.mrb[0].mxu0
    %v116 = vpop.f32.mrb[0].mxu0
    %117 = vdwg.mxu0
    %v118 = vmax.f32 %v113, 0.0
    %v119 = vld [vmem:[#allocation4] sm:$0xf]
    %v120 = vld [vmem:[#allocation4 + $0x4] sm:$0xf]
    %v121 = vld [vmem:[#allocation4 + $0x8] sm:$0xf]
    %v122 = vld [vmem:[#allocation4 + $0xc] sm:$0xf]
    %v123 = vld [vmem:[#allocation4 + $0x10] sm:$0xf]
    %v124 = vld [vmem:[#allocation4 + $0x14] sm:$0xf]
    %v125 = vld [vmem:[#allocation4 + $0x18] sm:$0xf]
    %v126 = vld [vmem:[#allocation4 + $0x1c] sm:$0xf]
    %v127 = vld [vmem:[#allocation4 + $0x20] sm:$0xf]
    %v128 = vld [vmem:[#allocation4 + $0x24] sm:$0xf]
    %v129 = vld [vmem:[#allocation4 + $0x28] sm:$0xf]
    %v130 = vld [vmem:[#allocation4 + $0x2c] sm:$0xf]
    %v131 = vld [vmem:[#allocation4 + $0x30] sm:$0xf]
    %v132 = vld [vmem:[#allocation4 + $0x34] sm:$0xf]
    %v133 = vld [vmem:[#allocation4 + $0x38] sm:$0xf]
    %v134 = vld [vmem:[#allocation4 + $0x3c] sm:$0xf]
    %v135 = vld [vmem:[#allocation4 + $0x40] sm:$0x1]
    %v136 = vunpack.c.l.bf16 %v135
    %v137 = vpack.c.bf16 %v118, %v118
    %v138 = vlaneseq
    %v139 = vshrl.u32 %v138, 7
    %v140 = vsub.s32 0, %v139
    %v141 = vrot.slane %v136, %v140
    %v158 = vunpack.c.l.b16 %v119
    %v159 = vunpack.c.l.b16 %v120
    %v160 = vunpack.c.l.b16 %v121
    %v161 = vunpack.c.l.b16 %v122
    %v162 = vunpack.c.l.b16 %v123
    %v163 = vunpack.c.l.b16 %v124
    %v164 = vunpack.c.l.b16 %v125
    %v165 = vunpack.c.l.b16 %v126
    %v166 = vunpack.c.l.b16 %v127
    %v167 = vunpack.c.l.b16 %v128
    %v168 = vunpack.c.l.b16 %v129
    %v169 = vunpack.c.l.b16 %v130
    %v170 = vunpack.c.l.b16 %v131
    %v171 = vunpack.c.l.b16 %v132
    %v172 = vunpack.c.l.b16 %v133
    %v173 = vunpack.c.l.b16 %v134
    %v174 = vpack.c.b16 %v159, %v158
    %v175 = vpack.c.b16 %v161, %v160
    %v176 = vpack.c.b16 %v163, %v162
    %v177 = vpack.c.b16 %v165, %v164
    %v178 = vpack.c.b16 %v167, %v166
    %v179 = vpack.c.b16 %v169, %v168
    %v180 = vpack.c.b16 %v171, %v170
    %v181 = vpack.c.b16 %v173, %v172
    %190 = vmatprep.subr.bf16.mxu0 0
    %191 = vmatpush1.bf16.msra.mxu0 %v174
    %192 = vmatprep.subr.bf16.mxu0 0
    %193 = vmatpush1.bf16.msra.mxu0 %v175
    %194 = vmatprep.subr.bf16.mxu0 0
    %195 = vmatpush1.bf16.msra.mxu0 %v176
    %196 = vmatprep.subr.bf16.mxu0 0
    %197 = vmatpush1.bf16.msra.mxu0 %v177
    %198 = vmatprep.subr.bf16.mxu0 0
    %199 = vmatpush1.bf16.msra.mxu0 %v178
    %200 = vmatprep.subr.bf16.mxu0 0
    %201 = vmatpush1.bf16.msra.mxu0 %v179
    %202 = vmatprep.subr.bf16.mxu0 0
    %203 = vmatpush1.bf16.msra.mxu0 %v180
    %204 = vmatprep.subr.bf16.mxu0 0
    %205 = vmatpush1.bf16.msra.mxu0 %v181
    %206 = vmatprep.subr.bf16.mxu0 0
    %207 = vmatpush1.bf16.msra.mxu0 0
    %208 = vmatprep.subr.bf16.mxu0 0
    %209 = vmatpush1.bf16.msra.mxu0 0
    %210 = vmatprep.subr.bf16.mxu0 0
    %211 = vmatpush1.bf16.msra.mxu0 0
    %212 = vmatprep.subr.bf16.mxu0 0
    %213 = vmatpush1.bf16.msra.mxu0 0
    %214 = vmatprep.subr.bf16.mxu0 0
    %215 = vmatpush1.bf16.msra.mxu0 0
    %216 = vmatprep.subr.bf16.mxu0 0
    %217 = vmatpush1.bf16.msra.mxu0 0
    %218 = vmatprep.subr.bf16.mxu0 0
    %219 = vmatpush1.bf16.msra.mxu0 0
    %220 = vmatprep.subr.bf16.mxu0 0
    %221 = vmatpush1.bf16.msra.mxu0 0
    %222 = vmatprep.mubr.bf16.mxu0 0
    %223 = vmatmul.mubr.bf16.gmra.mrb[0].mxu0 %v137
    %v224 = vpop.f32.mrb[0].mxu0
    %v225 = vadd.f32 %v141, %v224
    %v226 = vpop.f32.mrb[0].mxu0
    %v227 = vpop.f32.mrb[0].mxu0
    %v228 = vpop.f32.mrb[0].mxu0
    %229 = vdwg.mxu0
    %v230 = vmax.f32 %v225, 0.0
    %v231 = vld [vmem:[#allocation6] sm:$0xf]
    %v232 = vld [vmem:[#allocation6 + $0x4] sm:$0xf]
    %v233 = vld [vmem:[#allocation6 + $0x8] sm:$0xf]
    %v234 = vld [vmem:[#allocation6 + $0xc] sm:$0xf]
    %v235 = vld [vmem:[#allocation6 + $0x10] sm:$0xf]
    %v236 = vld [vmem:[#allocation6 + $0x14] sm:$0xf]
    %v237 = vld [vmem:[#allocation6 + $0x18] sm:$0xf]
    %v238 = vld [vmem:[#allocation6 + $0x1c] sm:$0xf]
    %v239 = vld [vmem:[#allocation6 + $0x20] sm:$0xf]
    %v240 = vld [vmem:[#allocation6 + $0x24] sm:$0xf]
    %v241 = vld [vmem:[#allocation6 + $0x28] sm:$0xf]
    %v242 = vld [vmem:[#allocation6 + $0x2c] sm:$0xf]
    %v243 = vld [vmem:[#allocation6 + $0x30] sm:$0xf]
    %v244 = vld [vmem:[#allocation6 + $0x34] sm:$0xf]
    %v245 = vld [vmem:[#allocation6 + $0x38] sm:$0xf]
    %v246 = vld [vmem:[#allocation6 + $0x3c] sm:$0xf]
    %v247 = vld [vmem:[#allocation6 + $0x40] sm:$0x1]
    %v248 = vunpack.c.l.bf16 %v247
    %v249 = vpack.c.bf16 %v230, %v230
    %v250 = vlaneseq
    %v251 = vshrl.u32 %v250, 7
    %v252 = vsub.s32 0, %v251
    %v253 = vrot.slane %v248, %v252
    %v270 = vunpack.c.l.b16 %v231
    %v271 = vunpack.c.l.b16 %v232
    %v272 = vunpack.c.l.b16 %v233
    %v273 = vunpack.c.l.b16 %v234
    %v274 = vunpack.c.l.b16 %v235
    %v275 = vunpack.c.l.b16 %v236
    %v276 = vunpack.c.l.b16 %v237
    %v277 = vunpack.c.l.b16 %v238
    %v278 = vunpack.c.l.b16 %v239
    %v279 = vunpack.c.l.b16 %v240
    %v280 = vunpack.c.l.b16 %v241
    %v281 = vunpack.c.l.b16 %v242
    %v282 = vunpack.c.l.b16 %v243
    %v283 = vunpack.c.l.b16 %v244
    %v284 = vunpack.c.l.b16 %v245
    %v285 = vunpack.c.l.b16 %v246
    %v286 = vpack.c.b16 %v271, %v270
    %v287 = vpack.c.b16 %v273, %v272
    %v288 = vpack.c.b16 %v275, %v274
    %v289 = vpack.c.b16 %v277, %v276
    %v290 = vpack.c.b16 %v279, %v278
    %v291 = vpack.c.b16 %v281, %v280
    %v292 = vpack.c.b16 %v283, %v282
    %v293 = vpack.c.b16 %v285, %v284
    %302 = vmatprep.subr.bf16.mxu0 0
    %303 = vmatpush1.bf16.msra.mxu0 %v286
    %304 = vmatprep.subr.bf16.mxu0 0
    %305 = vmatpush1.bf16.msra.mxu0 %v287
    %306 = vmatprep.subr.bf16.mxu0 0
    %307 = vmatpush1.bf16.msra.mxu0 %v288
    %308 = vmatprep.subr.bf16.mxu0 0
    %309 = vmatpush1.bf16.msra.mxu0 %v289
    %310 = vmatprep.subr.bf16.mxu0 0
    %311 = vmatpush1.bf16.msra.mxu0 %v290
    %312 = vmatprep.subr.bf16.mxu0 0
    %313 = vmatpush1.bf16.msra.mxu0 %v291
    %314 = vmatprep.subr.bf16.mxu0 0
    %315 = vmatpush1.bf16.msra.mxu0 %v292
    %316 = vmatprep.subr.bf16.mxu0 0
    %317 = vmatpush1.bf16.msra.mxu0 %v293
    %318 = vmatprep.subr.bf16.mxu0 0
    %319 = vmatpush1.bf16.msra.mxu0 0
    %320 = vmatprep.subr.bf16.mxu0 0
    %321 = vmatpush1.bf16.msra.mxu0 0
    %322 = vmatprep.subr.bf16.mxu0 0
    %323 = vmatpush1.bf16.msra.mxu0 0
    %324 = vmatprep.subr.bf16.mxu0 0
    %325 = vmatpush1.bf16.msra.mxu0 0
    %326 = vmatprep.subr.bf16.mxu0 0
    %327 = vmatpush1.bf16.msra.mxu0 0
    %328 = vmatprep.subr.bf16.mxu0 0
    %329 = vmatpush1.bf16.msra.mxu0 0
    %330 = vmatprep.subr.bf16.mxu0 0
    %331 = vmatpush1.bf16.msra.mxu0 0
    %332 = vmatprep.subr.bf16.mxu0 0
    %333 = vmatpush1.bf16.msra.mxu0 0
    %334 = vmatprep.mubr.bf16.mxu0 0
    %335 = vmatmul.mubr.bf16.gmra.mrb[0].mxu0 %v249
    %v336 = vpop.f32.mrb[0].mxu0
    %v337 = vadd.f32 %v253, %v336
    %v338 = vpop.f32.mrb[0].mxu0
    %v339 = vpop.f32.mrb[0].mxu0
    %v340 = vpop.f32.mrb[0].mxu0
    %341 = vdwg.mxu0
    %v342 = vlaneseq
    %v343 = vand.u32 %v342, 127
    %vm344 = vcmp.lt.s32.totalorder %v343, 64
    %vm345 = vcmp.ne.f32.partialorder %v337, %v337
    %v346 = vsel %vm344, 0.0, -2.0
    %v347 = vsel %vm345, %v346, %v337
    %v348 = vtanh.pop %v347
    %v349 = vadd.f32 %v348, 1.0
    %v350 = vmul.f32 %v349, 0.5
    %v351 = vmax.f32 %v347, -20.0
    %v352 = vmin.f32 %v351, 2.0
    %v353 = vmul.f32 %v352, 1.442695
    %v354 = vpow.pop %v353
    %v355 = vsel %vm344, 1, 0
    %vm356 = vcmp.eq.s32.totalorder %v355, 1
    %v357 = vsel %vm356, %v350, %v354
    %v358 = vpack.c.bf16 %v357, %v357
    %359 = vst [vmem:[%s4] sm:$0x1] %v358
    // Predicated region
    $region30: #{continuous_actor_forward.1} parent=1 // pred_check
      _
    $region31: #{continuous_actor_forward.1} parent=1 // pred_check_branch
      %361 = sbr.rel (0) target = $region33
    $region32: #{continuous_actor_forward.1} parent=1 // pred_region
      _
    $region33: #{continuous_actor_forward.1} parent=1 // pred_fallthru
      _
    // Predicated region
    $region34: #{continuous_actor_forward.1} parent=1 // pred_check
      _
    $region35: #{continuous_actor_forward.1} parent=1 // pred_check_branch
      %363 = sbr.rel (0) target = $region37
    $region36: #{continuous_actor_forward.1} parent=1 // pred_region
      _
    $region37: #{continuous_actor_forward.1} parent=1 // pred_fallthru
      _
    %364 = vsyncpa [#allocation3], 1
    %365 = vsyncpa [#allocation5], 1

</llo_original>
